<compile_context>
chip_gen: v6e
topology: v6e:2x2x1
jax: 0.10.0
libtpu: 0.0.40
codegen_flags: <defaults>
</compile_context>

<pallas_src>
import jax
import jax.numpy as jnp
from jax.experimental import pallas as pl
from jax.experimental.pallas import tpu as pltpu

_LANES = 128


# --------------------------------------------------------------------------
# Pallas kernel: eight masked reductions, accumulated as
# (8 quantities x 8 sublane-partials x 128 lane-partials) into a per
# (batch, split) resident VMEM block.  Quantity order:
#   0: sum(gs * ms)                    positive sum (gt*mask)
#   1: sum(ms)                         shrink-mask sum (neg = q1 - q0)
#   2: sum(p_shrink * gs * ms)         dice intersection (shrink)
#   3: sum(p_shrink * ms)              dice pred*mask    (shrink)
#   4: sum(p_binary * gs * ms)         dice intersection (binary)
#   5: sum(p_binary * ms)              dice pred*mask    (binary)
#   6: sum(|p_thresh - gt_t| * m_t)    MaskL1 numerator
#   7: sum(m_t)                        MaskL1 denominator
# Inputs stream in their native (narrow) dtypes and are upcast to f32 in
# registers; accumulation is f32 so integer pixel counts stay exact.
# --------------------------------------------------------------------------
def _db_sums_kernel(pred_ref, gt_t_ref, m_t_ref, gs_ref, ms_ref, acc_ref):
    t = pl.program_id(2)

    @pl.when(t == 0)
    def _init():
        acc_ref[...] = jnp.zeros_like(acc_ref)

    f32 = jnp.float32
    ps = pred_ref[0, 0].astype(f32)      # (tile_r, 128) shrink map
    pt = pred_ref[0, 1].astype(f32)      # threshold map
    pb = pred_ref[0, 2].astype(f32)      # binary map
    gt_t = gt_t_ref[0].astype(f32)
    m_t = m_t_ref[0].astype(f32)
    gs = gs_ref[0].astype(f32)
    ms = ms_ref[0].astype(f32)
    # TODO(synk): on v7x (where dtype compression flips the kernel toward
    # VALU-bound) the products could be done in packed bf16 with f32
    # accumulation for ~2x VALU throughput; kept f32 here for exactness.

    gm = gs * ms                          # gt * mask (positive map)

    tile_r, lanes = gm.shape
    n8 = tile_r // 8

    def part(x):
        # Keep 8-sublane x 128-lane partials: pure full-vreg VALU adds, no
        # per-step cross-sublane (XLU) reduce; final reduce happens in glue.
        return jnp.sum(x.reshape(n8, 8, lanes), axis=0)

    stacked = jnp.concatenate(
        [part(gm), part(ms),
         part(ps * gm), part(ps * ms),
         part(pb * gm), part(pb * ms),
         part(jnp.abs(pt - gt_t) * m_t), part(m_t)],
        axis=0)                           # (64, 128), (8,128)-tile aligned

    # Single unmasked full-vreg accumulator update (no (1,128) masked RMW).
    acc_ref[0, 0] += stacked


# --------------------------------------------------------------------------
# Layout selection / padding helpers.
# --------------------------------------------------------------------------
def _choose_layout(hw, streams, budget_bytes):
    """streams: list of (itemsize_bytes, n_maps). Returns (rows_pad, tile_r, n_t)
    with rows_pad a multiple of the sublane granularity, tile_r a multiple of
    it that divides rows_pad, and the double-buffered tile within budget."""
    gran = 8
    bytes_per_row = 0
    for itemsize, nmaps in streams:
        gran = max(gran, max(8, 32 // itemsize))   # f32->8, bf16->16, i8->32
        bytes_per_row += itemsize * nmaps * _LANES

    rows = pl.cdiv(pl.cdiv(hw, _LANES), gran) * gran

    max_rows = max(gran, (budget_bytes // (2 * bytes_per_row) // gran) * gran)

    if rows <= max_rows:
        tile_r = rows
        # Prefer >= 2 tiles per image so the second "parallel" grid axis can
        # keep both v7x TensorCores busy even at batch == 1.
        if tile_r >= 2 * gran and tile_r % (2 * gran) == 0:
            tile_r //= 2
        return rows, tile_r, rows // tile_r

    # Prefer a divisor of `rows` (no padding copy); if only small divisors
    # exist, pad rows up so a near-budget tile can be used instead.
    best = gran
    d = max_rows
    while d >= gran:
        if rows % d == 0:
            best = d
            break
        d -= gran
    if best * 2 >= max_rows:
        tile_r, rows_pad = best, rows
    else:
        tile_r = max_rows
        rows_pad = pl.cdiv(rows, tile_r) * tile_r
    return rows_pad, tile_r, rows_pad // tile_r


def _as_tiles(x, rows_pad):
    """(B, ..., H, W) -> (B, ..., rows_pad, 128); flat pixel axis zero-padded.
    Zero-padded pixels are exact: every reduced term carries a mask factor."""
    lead = x.shape[:-2]
    hw = x.shape[-2] * x.shape[-1]
    total = rows_pad * _LANES
    flat = x.reshape(lead + (hw,))        # contiguous reshape: no HBM copy
    if total != hw:
        flat = jnp.pad(flat, [(0, 0)] * len(lead) + [(0, total - hw)])
    return flat.reshape(lead + (rows_pad, _LANES))


def _narrow(x):
    # Pass arrays through in their native (ideally narrow) dtype; only bools
    # are widened to int8 (no 1-bit vector layout).
    return x.astype(jnp.int8) if x.dtype == jnp.bool_ else x


def _db_sums(pred, gt_t, m_t, gs, ms, *, budget_bytes=12 * 1024 * 1024):
    """pred: (B, 3, H, W); label maps: (B, H, W), any dtypes.  Returns (8,) f32."""
    b, c, h, w = pred.shape
    assert c == 3
    hw = h * w

    streams = [(jnp.dtype(pred.dtype).itemsize, 3)] + \
              [(jnp.dtype(a.dtype).itemsize, 1) for a in (gt_t, m_t, gs, ms)]
    rows_pad, tile_r, n_t = _choose_layout(hw, streams, budget_bytes)

    # Second "parallel" grid axis: split the row-tile range per image so both
    # v7x TensorCores have work at B == 1 (harmless on single-TC v5e/v6e).
    n_splits = 2 if (n_t >= 2 and n_t % 2 == 0) else 1
    n_tps = n_t // n_splits

    pred2 = _as_tiles(pred, rows_pad)            # (B, 3, rows_pad, 128)
    gt_t2 = _as_tiles(gt_t, rows_pad)            # (B, rows_pad, 128)
    m_t2 = _as_tiles(m_t, rows_pad)
    gs2 = _as_tiles(gs, rows_pad)
    ms2 = _as_tiles(ms, rows_pad)

    pred_spec = pl.BlockSpec((1, 3, tile_r, _LANES),
                             lambda bi, si, ti: (bi, 0, si * n_tps + ti, 0))
    lab_spec = pl.BlockSpec((1, tile_r, _LANES),
                            lambda bi, si, ti: (bi, si * n_tps + ti, 0))
    out_spec = pl.BlockSpec((1, 1, 64, _LANES),
                            lambda bi, si, ti: (bi, si, 0, 0))

    bytes_per_pixel = sum(isz * nm for isz, nm in streams)
    in_bytes = bytes_per_pixel * b * rows_pad * _LANES
    out_bytes = b * n_splits * 64 * _LANES * 4
    cost = pl.CostEstimate(flops=24 * b * rows_pad * _LANES,
                           transcendentals=0,
                           bytes_accessed=in_bytes + out_bytes)

    # Explicit scoped-VMEM limit: double-buffered inputs + acc block + slack.
    step_in_bytes = bytes_per_pixel * tile_r * _LANES
    vmem_limit = min(max(2 * step_in_bytes + 2 * 64 * _LANES * 4 + (4 << 20),
                         16 << 20), 32 << 20)

    acc = pl.pallas_call(
        _db_sums_kernel,
        out_shape=jax.ShapeDtypeStruct((b, n_splits, 64, _LANES), jnp.float32),
        grid_spec=pltpu.PrefetchScalarGridSpec(
            num_scalar_prefetch=0,
            grid=(b, n_splits, n_tps),
            in_specs=[pred_spec, lab_spec, lab_spec, lab_spec, lab_spec],
            out_specs=out_spec,
        ),
        compiler_params=pltpu.CompilerParams(
            dimension_semantics=("parallel", "parallel", "arbitrary"),
            vmem_limit_bytes=vmem_limit),
        cost_estimate=cost,
    )(pred2, gt_t2, m_t2, gs2, ms2)

    # Tiny final reduction in XLA glue: batch, split, 8 sublanes, 128 lanes.
    return jnp.sum(acc.reshape(b, n_splits, 8, 8, _LANES), axis=(0, 1, 3, 4))


# --------------------------------------------------------------------------
# DBLoss forward (alpha=5, beta=10, ohem_ratio=3, balance_loss=True,
# main_loss_type='DiceLoss', eps=1e-6) — no learnable parameters.
# --------------------------------------------------------------------------
def db_loss_forward(predicts, labels, *, alpha=5.0, beta=10.0, ohem_ratio=3.0,
                    eps=1e-6, budget_bytes=12 * 1024 * 1024):
    predict_maps = predicts["res"]
    (label_threshold_map, label_threshold_mask,
     label_shrink_map, label_shrink_mask) = labels[1:]

    # Stream everything in its native dtype (masks ideally int8/uint8,
    # threshold map bf16, predictions f32/bf16); the kernel upcasts in-vreg.
    pred = predict_maps
    gt_t = _narrow(label_threshold_map)
    m_t = _narrow(label_threshold_mask)
    gs = _narrow(label_shrink_map)
    ms = _narrow(label_shrink_mask)

    sums = _db_sums(pred, gt_t, m_t, gs, ms, budget_bytes=budget_bytes)
    (pos_sum, ms_sum, inter_s, predmask_s,
     inter_b, predmask_b, l1_num, l1_den) = sums
    neg_sum = ms_sum - pos_sum            # sum((1 - gs) * ms), exact algebra

    # --- BalanceLoss(shrink) with DiceLoss as the inner loss ---------------
    dice_s = 1.0 - 2.0 * inter_s / (predmask_s + pos_sum + eps)
    positive_count = jnp.floor(pos_sum)   # exact while B*H*W < 2**24
    negative_count = jnp.floor(jnp.minimum(neg_sum, positive_count * ohem_ratio))

    positive_loss_sum = pos_sum * dice_s
    # OHEM top-k closed form: with {0,1} gt/mask maps and preds in [0,1] each
    # negative pixel's loss equals dice_s >= 0 and negative_count never
    # exceeds the number of negatives, so the top-k sum == dice_s * count.
    topk_sum = dice_s * negative_count

    loss_with_neg = (positive_loss_sum + topk_sum) / \
        (positive_count + negative_count + eps)
    loss_no_neg = positive_loss_sum / (positive_count + eps)
    loss_shrink_maps = jnp.where(negative_count > 0, loss_with_neg, loss_no_neg)

    # --- MaskL1Loss(threshold) ----------------------------------------------
    loss_threshold_maps = l1_num / (l1_den + eps)

    # --- DiceLoss(binary) ----------------------------------------------------
    loss_binary_maps = 1.0 - 2.0 * inter_b / (predmask_b + pos_sum + eps)

    loss_shrink_maps = alpha * loss_shrink_maps
    loss_threshold_maps = beta * loss_threshold_maps

    # TODO(synk): the optional 'distance_maps'/'cbn_maps' branch (BalanceLoss
    # on cbn_maps) is not implemented; like the PyTorch default path, cbn loss
    # is a zero tensor.
    cbn_loss = jnp.zeros((1,), jnp.float32)

    loss_all = loss_shrink_maps + loss_threshold_maps + loss_binary_maps
    return {
        "loss": loss_all + cbn_loss,
        "loss_shrink_maps": loss_shrink_maps,
        "loss_threshold_maps": loss_threshold_maps,
        "loss_binary_maps": loss_binary_maps,
        "loss_cbn": cbn_loss,
    }


# --------------------------------------------------------------------------
# Pure-JAX reference (literal transcription of the PyTorch math, including
# the OHEM sort) for a correctness check of the kernel + closed-form top-k.
# --------------------------------------------------------------------------
def _db_loss_ref(predicts, labels, alpha=5.0, beta=10.0, ratio=3.0, eps=1e-6):
    pm = predicts["res"].astype(jnp.float32)
    ltm, ltmask, lsm, lsmask = [x.astype(jnp.float32) for x in labels[1:]]
    shrink, thresh, binary = pm[:, 0], pm[:, 1], pm[:, 2]

    def dice(pred, gt, mask):
        inter = jnp.sum(pred * gt * mask)
        union = jnp.sum(pred * mask) + jnp.sum(gt * mask) + eps
        return 1.0 - 2.0 * inter / union

    def mask_l1(pred, gt, mask):
        return jnp.sum(jnp.abs(pred - gt) * mask) / (jnp.sum(mask) + eps)

    def balance(pred, gt, mask):
        positive = gt * mask
        negative = (1.0 - gt) * mask
        pc = jnp.floor(jnp.sum(positive))
        nc = jnp.floor(jnp.minimum(jnp.sum(negative), pc * ratio))
        loss = dice(pred, gt, mask)
        pl_sum = jnp.sum(positive * loss)
        nl = (negative * loss).reshape(-1)
        sd = -jnp.sort(-nl)
        topk = jnp.sum(jnp.where(jnp.arange(sd.shape[0]) < nc, sd, 0.0))
        return jnp.where(nc > 0, (pl_sum + topk) / (pc + nc + eps),
                         pl_sum / (pc + eps))

    ls = alpha * balance(shrink, lsm, lsmask)
    lt = beta * mask_l1(thresh, ltm, ltmask)
    lb = dice(binary, lsm, lsmask)
    return ls + lt + lb


if __name__ == "__main__":
    key = jax.random.PRNGKey(0)
    B, H, W = 2, 128, 128
    k1, k2, k3, k4, k5 = jax.random.split(key, 5)

    # predicts['res']: (B, 3, H, W) sigmoid-like maps in [0, 1] (f32).
    predict_maps = jax.nn.sigmoid(jax.random.normal(k1, (B, 3, H, W),
                                                    jnp.float32))
    # Label maps arrive in narrow native dtypes: bf16 threshold map, int8 masks.
    label_threshold_map = jax.random.uniform(
        k2, (B, H, W), jnp.float32, minval=0.3, maxval=0.7).astype(jnp.bfloat16)
    label_threshold_mask = (jax.random.uniform(k3, (B, H, W)) > 0.3
                            ).astype(jnp.int8)
    label_shrink_map = (jax.random.uniform(k4, (B, H, W)) > 0.5
                        ).astype(jnp.int8)
    label_shrink_mask = (jax.random.uniform(k5, (B, H, W)) > 0.2
                         ).astype(jnp.int8)

    predicts = {"res": predict_maps}
    # labels[0] is the image (unused by the loss); labels[1:] are the 4 maps.
    labels = [None, label_threshold_map, label_threshold_mask,
              label_shrink_map, label_shrink_mask]

    losses = jax.block_until_ready(db_loss_forward(predicts, labels))
    ref_total = jax.block_until_ready(_db_loss_ref(predicts, labels))
    assert jnp.allclose(losses["loss"][0], ref_total, rtol=1e-4, atol=1e-4), \
        (losses["loss"], ref_total)

    # Exercise the multi-tile / split / t-accumulation paths (tiny VMEM budget).
    losses_small = jax.block_until_ready(
        db_loss_forward(predicts, labels, budget_bytes=64 * 1024))
    assert jnp.allclose(losses_small["loss"][0], ref_total,
                        rtol=1e-4, atol=1e-4), (losses_small["loss"], ref_total)

    # Exercise the non-128-divisible (zero-padded lane-dense) layout path.
    Hp, Wp = 24, 20
    predicts_p = {"res": predict_maps[:, :, :Hp, :Wp]}
    labels_p = [None, label_threshold_map[:, :Hp, :Wp],
                label_threshold_mask[:, :Hp, :Wp],
                label_shrink_map[:, :Hp, :Wp],
                label_shrink_mask[:, :Hp, :Wp]]
    losses_p = jax.block_until_ready(db_loss_forward(predicts_p, labels_p))
    ref_p = jax.block_until_ready(_db_loss_ref(predicts_p, labels_p))
    assert jnp.allclose(losses_p["loss"][0], ref_p, rtol=1e-4, atol=1e-4), \
        (losses_p["loss"], ref_p)

    print("KERNEL_OK")
</pallas_src>

<mosaic_0001>
module attributes {stable_mosaic.version = 11 : i64} {
  func.func @_db_sums_kernel(%arg0: i32, %arg1: i32, %arg2: i32, %arg3: memref<1x3x64x128xf32, #tpu.memory_space<vmem>>, %arg4: memref<1x64x128xbf16, #tpu.memory_space<vmem>>, %arg5: memref<1x64x128xi8, #tpu.memory_space<vmem>>, %arg6: memref<1x64x128xi8, #tpu.memory_space<vmem>>, %arg7: memref<1x64x128xi8, #tpu.memory_space<vmem>>, %arg8: memref<1x1x64x128xf32, #tpu.memory_space<vmem>>) attributes {dimension_semantics = [#tpu.dimension_semantics<parallel>, #tpu.dimension_semantics<parallel>, #tpu.dimension_semantics<arbitrary>], iteration_bounds = array<i64: 2, 2, 1>, scalar_prefetch = 0 : i64, scratch_operands = 0 : i64, tpu.core_type = #tpu.core_type<tc>, window_params = [{transform_indices = @transform_0, window_bounds = array<i64: 1, 3, 64, 128>}, {transform_indices = @transform_1, window_bounds = array<i64: 1, 64, 128>}, {transform_indices = @transform_2, window_bounds = array<i64: 1, 64, 128>}, {transform_indices = @transform_3, window_bounds = array<i64: 1, 64, 128>}, {transform_indices = @transform_4, window_bounds = array<i64: 1, 64, 128>}, {transform_indices = @transform_5, window_bounds = array<i64: 1, 1, 64, 128>}]} {
    %c0_i32 = arith.constant 0 : i32
    %0 = arith.cmpi eq, %arg2, %c0_i32 : i32
    %1 = arith.extui %0 : i1 to i32
    %c0_i32_0 = arith.constant 0 : i32
    %2 = arith.cmpi ne, %1, %c0_i32_0 : i32
    scf.if %2 {
      %cst_37 = arith.constant 0.000000e+00 : f32
      %52 = vector.broadcast %cst_37 : f32 to vector<1x1x64x128xf32>
      %c0_38 = arith.constant 0 : index
      %c0_39 = arith.constant 0 : index
      %c0_40 = arith.constant 0 : index
      %c0_41 = arith.constant 0 : index
      %53 = vector.load %arg8[%c0_38, %c0_39, %c0_40, %c0_41] : memref<1x1x64x128xf32, #tpu.memory_space<vmem>>, vector<1x1x64x128xf32>
      tpu.vector_store %arg8[%c0_38, %c0_39, %c0_40, %c0_41], %52 {strides = array<i32>} : memref<1x1x64x128xf32, #tpu.memory_space<vmem>>, vector<1x1x64x128xf32>,
    } else {
    }
    %c0 = arith.constant 0 : index
    %c0_1 = arith.constant 0 : index
    %c0_2 = arith.constant 0 : index
    %c0_3 = arith.constant 0 : index
    %3 = vector.load %arg3[%c0, %c0_1, %c0_2, %c0_3] : memref<1x3x64x128xf32, #tpu.memory_space<vmem>>, vector<1x1x64x128xf32>
    %4 = vector.shape_cast %3 : vector<1x1x64x128xf32> to vector<64x128xf32>
    %c0_4 = arith.constant 0 : index
    %c1 = arith.constant 1 : index
    %c0_5 = arith.constant 0 : index
    %c0_6 = arith.constant 0 : index
    %5 = vector.load %arg3[%c0_4, %c1, %c0_5, %c0_6] : memref<1x3x64x128xf32, #tpu.memory_space<vmem>>, vector<1x1x64x128xf32>
    %6 = vector.shape_cast %5 : vector<1x1x64x128xf32> to vector<64x128xf32>
    %c0_7 = arith.constant 0 : index
    %c2 = arith.constant 2 : index
    %c0_8 = arith.constant 0 : index
    %c0_9 = arith.constant 0 : index
    %7 = vector.load %arg3[%c0_7, %c2, %c0_8, %c0_9] : memref<1x3x64x128xf32, #tpu.memory_space<vmem>>, vector<1x1x64x128xf32>
    %8 = vector.shape_cast %7 : vector<1x1x64x128xf32> to vector<64x128xf32>
    %c0_10 = arith.constant 0 : index
    %c0_11 = arith.constant 0 : index
    %c0_12 = arith.constant 0 : index
    %9 = vector.load %arg4[%c0_10, %c0_11, %c0_12] : memref<1x64x128xbf16, #tpu.memory_space<vmem>>, vector<1x64x128xbf16>
    %10 = vector.shape_cast %9 : vector<1x64x128xbf16> to vector<64x128xbf16>
    %11 = arith.extf %10 : vector<64x128xbf16> to vector<64x128xf32>
    %c0_13 = arith.constant 0 : index
    %c0_14 = arith.constant 0 : index
    %c0_15 = arith.constant 0 : index
    %12 = vector.load %arg5[%c0_13, %c0_14, %c0_15] : memref<1x64x128xi8, #tpu.memory_space<vmem>>, vector<1x64x128xi8>
    %13 = vector.shape_cast %12 : vector<1x64x128xi8> to vector<64x128xi8>
    %14 = arith.sitofp %13 : vector<64x128xi8> to vector<64x128xf32>
    %c0_16 = arith.constant 0 : index
    %c0_17 = arith.constant 0 : index
    %c0_18 = arith.constant 0 : index
    %15 = vector.load %arg6[%c0_16, %c0_17, %c0_18] : memref<1x64x128xi8, #tpu.memory_space<vmem>>, vector<1x64x128xi8>
    %16 = vector.shape_cast %15 : vector<1x64x128xi8> to vector<64x128xi8>
    %17 = arith.sitofp %16 : vector<64x128xi8> to vector<64x128xf32>
    %c0_19 = arith.constant 0 : index
    %c0_20 = arith.constant 0 : index
    %c0_21 = arith.constant 0 : index
    %18 = vector.load %arg7[%c0_19, %c0_20, %c0_21] : memref<1x64x128xi8, #tpu.memory_space<vmem>>, vector<1x64x128xi8>
    %19 = vector.shape_cast %18 : vector<1x64x128xi8> to vector<64x128xi8>
    %20 = arith.sitofp %19 : vector<64x128xi8> to vector<64x128xf32>
    %21 = arith.mulf %17, %20 : vector<64x128xf32>
    %22 = vector.shape_cast %21 : vector<64x128xf32> to vector<8x8x128xf32>
    %cst = arith.constant dense<0.000000e+00> : vector<8x128xf32>
    %23 = vector.multi_reduction <add>, %22, %cst [0] : vector<8x8x128xf32> to vector<8x128xf32>
    %24 = vector.shape_cast %20 : vector<64x128xf32> to vector<8x8x128xf32>
    %cst_22 = arith.constant dense<0.000000e+00> : vector<8x128xf32>
    %25 = vector.multi_reduction <add>, %24, %cst_22 [0] : vector<8x8x128xf32> to vector<8x128xf32>
    %26 = arith.mulf %4, %21 : vector<64x128xf32>
    %27 = vector.shape_cast %26 : vector<64x128xf32> to vector<8x8x128xf32>
    %cst_23 = arith.constant dense<0.000000e+00> : vector<8x128xf32>
    %28 = vector.multi_reduction <add>, %27, %cst_23 [0] : vector<8x8x128xf32> to vector<8x128xf32>
    %29 = arith.mulf %4, %20 : vector<64x128xf32>
    %30 = vector.shape_cast %29 : vector<64x128xf32> to vector<8x8x128xf32>
    %cst_24 = arith.constant dense<0.000000e+00> : vector<8x128xf32>
    %31 = vector.multi_reduction <add>, %30, %cst_24 [0] : vector<8x8x128xf32> to vector<8x128xf32>
    %32 = arith.mulf %8, %21 : vector<64x128xf32>
    %33 = vector.shape_cast %32 : vector<64x128xf32> to vector<8x8x128xf32>
    %cst_25 = arith.constant dense<0.000000e+00> : vector<8x128xf32>
    %34 = vector.multi_reduction <add>, %33, %cst_25 [0] : vector<8x8x128xf32> to vector<8x128xf32>
    %35 = arith.mulf %8, %20 : vector<64x128xf32>
    %36 = vector.shape_cast %35 : vector<64x128xf32> to vector<8x8x128xf32>
    %cst_26 = arith.constant dense<0.000000e+00> : vector<8x128xf32>
    %37 = vector.multi_reduction <add>, %36, %cst_26 [0] : vector<8x8x128xf32> to vector<8x128xf32>
    %38 = arith.subf %6, %11 : vector<64x128xf32>
    %39 = math.absf %38 : vector<64x128xf32>
    %40 = arith.mulf %39, %14 : vector<64x128xf32>
    %41 = vector.shape_cast %40 : vector<64x128xf32> to vector<8x8x128xf32>
    %cst_27 = arith.constant dense<0.000000e+00> : vector<8x128xf32>
    %42 = vector.multi_reduction <add>, %41, %cst_27 [0] : vector<8x8x128xf32> to vector<8x128xf32>
    %43 = vector.shape_cast %14 : vector<64x128xf32> to vector<8x8x128xf32>
    %cst_28 = arith.constant dense<0.000000e+00> : vector<8x128xf32>
    %44 = vector.multi_reduction <add>, %43, %cst_28 [0] : vector<8x8x128xf32> to vector<8x128xf32>
    %45 = tpu.concatenate %23, %25, %28, %31, %34, %37, %42, %44 in 0 : vector<8x128xf32>, vector<8x128xf32>, vector<8x128xf32>, vector<8x128xf32>, vector<8x128xf32>, vector<8x128xf32>, vector<8x128xf32>, vector<8x128xf32> -> vector<64x128xf32>
    %c0_29 = arith.constant 0 : index
    %c0_30 = arith.constant 0 : index
    %c0_31 = arith.constant 0 : index
    %c0_32 = arith.constant 0 : index
    %46 = vector.load %arg8[%c0_29, %c0_30, %c0_31, %c0_32] : memref<1x1x64x128xf32, #tpu.memory_space<vmem>>, vector<1x1x64x128xf32>
    %47 = vector.shape_cast %46 : vector<1x1x64x128xf32> to vector<64x128xf32>
    %48 = arith.addf %47, %45 : vector<64x128xf32>
    %c0_33 = arith.constant 0 : index
    %c0_34 = arith.constant 0 : index
    %c0_35 = arith.constant 0 : index
    %c0_36 = arith.constant 0 : index
    %49 = vector.load %arg8[%c0_33, %c0_34, %c0_35, %c0_36] : memref<1x1x64x128xf32, #tpu.memory_space<vmem>>, vector<1x1x64x128xf32>
    %50 = vector.shape_cast %49 : vector<1x1x64x128xf32> to vector<64x128xf32>
    %51 = vector.shape_cast %48 : vector<64x128xf32> to vector<1x1x64x128xf32>
    tpu.vector_store %arg8[%c0_33, %c0_34, %c0_35, %c0_36], %51 {strides = array<i32>} : memref<1x1x64x128xf32, #tpu.memory_space<vmem>>, vector<1x1x64x128xf32>,
    return
  }
  func.func @transform_0(%arg0: i32, %arg1: i32, %arg2: i32) -> (i32, i32, i32, i32) {
    %c1_i32 = arith.constant 1 : i32
    %0 = arith.muli %arg1, %c1_i32 : i32
    %1 = arith.addi %0, %arg2 : i32
    %c0_i32 = arith.constant 0 : i32
    %c0_i32_0 = arith.constant 0 : i32
    %c0_i32_1 = arith.constant 0 : i32
    return %arg0, %c0_i32, %1, %c0_i32_0 : i32, i32, i32, i32
  }
  func.func @transform_1(%arg0: i32, %arg1: i32, %arg2: i32) -> (i32, i32, i32) {
    %c1_i32 = arith.constant 1 : i32
    %0 = arith.muli %arg1, %c1_i32 : i32
    %1 = arith.addi %0, %arg2 : i32
    %c0_i32 = arith.constant 0 : i32
    %c0_i32_0 = arith.constant 0 : i32
    return %arg0, %1, %c0_i32 : i32, i32, i32
  }
  func.func @transform_2(%arg0: i32, %arg1: i32, %arg2: i32) -> (i32, i32, i32) {
    %c1_i32 = arith.constant 1 : i32
    %0 = arith.muli %arg1, %c1_i32 : i32
    %1 = arith.addi %0, %arg2 : i32
    %c0_i32 = arith.constant 0 : i32
    %c0_i32_0 = arith.constant 0 : i32
    return %arg0, %1, %c0_i32 : i32, i32, i32
  }
  func.func @transform_3(%arg0: i32, %arg1: i32, %arg2: i32) -> (i32, i32, i32) {
    %c1_i32 = arith.constant 1 : i32
    %0 = arith.muli %arg1, %c1_i32 : i32
    %1 = arith.addi %0, %arg2 : i32
    %c0_i32 = arith.constant 0 : i32
    %c0_i32_0 = arith.constant 0 : i32
    return %arg0, %1, %c0_i32 : i32, i32, i32
  }
  func.func @transform_4(%arg0: i32, %arg1: i32, %arg2: i32) -> (i32, i32, i32) {
    %c1_i32 = arith.constant 1 : i32
    %0 = arith.muli %arg1, %c1_i32 : i32
    %1 = arith.addi %0, %arg2 : i32
    %c0_i32 = arith.constant 0 : i32
    %c0_i32_0 = arith.constant 0 : i32
    return %arg0, %1, %c0_i32 : i32, i32, i32
  }
  func.func @transform_5(%arg0: i32, %arg1: i32, %arg2: i32) -> (i32, i32, i32, i32) {
    %c0_i32 = arith.constant 0 : i32
    %c0_i32_0 = arith.constant 0 : i32
    %c0_i32_1 = arith.constant 0 : i32
    return %arg0, %arg1, %c0_i32, %c0_i32_0 : i32, i32, i32, i32
  }
}

</mosaic_0001>

<llo_original>
// kernel: tpu_custom_call.1
$region0: #{tpu_custom_call.1}
  #allocation0 [shape = 'u32[]', space=smem, size = 0x4, offset = 0x4, fixed_abs, tag = 'smem constant byte address 0x4 - core index']
  #allocation1 [shape = 'u32[144,128]{1,0:T(1,128)}', space=vmem, size = 0x12000, scoped, tag = 'internal scratch']
  #allocation12 [shape = 's32[]', space=sflag, size = 0x4, offset = 0, fixed_abs, tag = 'sflag constant byte address 0x0 - dummy sync flag']
  %s0 = inlined_call_operand.hbm [shape: f32[2,3,128,128], index: 0, kind: input, shape index: {}]
  %s1 = inlined_call_operand.hbm [shape: bf16[2,128,128], index: 1, kind: input, shape index: {}]
  %s2 = inlined_call_operand.hbm [shape: s8[2,128,128], index: 2, kind: input, shape index: {}]
  %s3 = inlined_call_operand.hbm [shape: s8[2,128,128], index: 3, kind: input, shape index: {}]
  %s4 = inlined_call_operand.hbm [shape: s8[2,128,128], index: 4, kind: input, shape index: {}]
  %s5 = inlined_call_operand.hbm [shape: f32[2,2,64,128], index: 5, kind: output, shape index: {}]
  %s6 = sld [smem:[#allocation0]]
  $region77: #{tpu_custom_call.1} parent=0
    _
  %s8 = ssub.s32 1, %s6
  %s9 = scalar_select 0, %s8, %s6
  $region1: #{tpu_custom_call.1} parent=0
    #allocation2 [shape = 'u8[196608]{0}', space=vmem, size = 0x30000, scoped, tag = 'input window, operand 0']
    #allocation3 [shape = 's32[2]{0}', space=sflag, size = 0x8, scoped, tag = 'scoped memory for tpu_custom_call.1']
    #allocation4 [shape = 's32[2]{0}', space=sflag, size = 0x8, scoped, tag = 'scoped memory for tpu_custom_call.1']
    #allocation5 [shape = 'u8[32768]{0}', space=vmem, size = 0x8000, scoped, tag = 'input window, operand 1']
    #allocation6 [shape = 's32[2]{0}', space=sflag, size = 0x8, scoped, tag = 'scoped memory for tpu_custom_call.1']
    #allocation7 [shape = 'u8[16384]{0}', space=vmem, size = 0x4000, scoped, tag = 'input window, operand 2']
    #allocation8 [shape = 'u8[16384]{0}', space=vmem, size = 0x4000, scoped, tag = 'input window, operand 3']
    #allocation9 [shape = 's32[2]{0}', space=sflag, size = 0x8, scoped, tag = 'scoped memory for tpu_custom_call.1']
    #allocation10 [shape = 'u8[16384]{0}', space=vmem, size = 0x4000, scoped, tag = 'input window, operand 4']
    #allocation11 [shape = 'u8[65536]{0}', space=vmem, size = 0x10000, scoped, tag = 'output window, operand 0']
    %10 = vsyncpa [#allocation3], 0
    %s11 = scalar_lea.sflag [#allocation3], 1
    %12 = vsyncpa %s11, 0
    %13 = vsyncpa [#allocation6], 0
    %s14 = scalar_lea.sflag [#allocation6], 1
    %15 = vsyncpa %s14, 0
    %16 = vsyncpa [#allocation9], 0
    %s17 = scalar_lea.sflag [#allocation9], 1
    %18 = vsyncpa %s17, 0
    %19 = vsyncpa [#allocation4], 0
    %s20 = scalar_lea.sflag [#allocation4], 1
    %21 = vsyncpa %s20, 0
    loop: start=0, step=1, limit=6
    $region2: #{tpu_custom_call.1} parent=1 // loop_pre_header
      _
    $region3: #{tpu_custom_call.1} parent=1 // loop_header
      %s23 = sphi 0, %s27
      %p24 = scmp.ge.s32.totalorder %s23, 6
      %s30 = sphi 0, %s49
      %s31 = sphi 0, %s45
      %s32 = sphi 0, %s41
      %s33 = sphi 0, %s30
      %s34 = sphi 0, %s31
      %s35 = sphi 0, %s32
      %s36 = sphi 0, %s33
      %s37 = sphi 0, %s34
      %s38 = sphi 0, %s35
      %s56 = sphi 0, %s58
      %s59 = sphi 0, %s56
      %s60 = sphi 0, %s59
      %s76 = sphi 0, %s60
      %s86 = sphi 0, %s88
      %s89 = sphi 0, %s86
      %s90 = sphi 0, %s89
      %s106 = sphi 0, %s90
      %s116 = sphi 0, %s118
      %s119 = sphi 0, %s116
      %s120 = sphi 0, %s119
      %s136 = sphi 0, %s120
      %s146 = sphi 0, %s148
      %s149 = sphi 0, %s146
      %s150 = sphi 0, %s149
      %s166 = sphi 0, %s150
      %s176 = sphi 0, %s178
      %s179 = sphi 0, %s176
      %s180 = sphi 0, %s179
      %s196 = sphi 0, %s180
      %s204 = sphi 0, %s206
      %s207 = sphi 0, %s204
      %s208 = sphi 0, %s207
      %s224 = sphi 0, %s208
    $region4: #{tpu_custom_call.1} parent=1 // loop_header_branch
      %26 = sbr.rel (%p24) target = $region8
    $region5: #{tpu_custom_call.1} parent=1 // loop_body
      %s28 = ssub.s32 %s23, 1
      %s29 = ssub.s32 %s23, 2
      %s39 = sadd.s32 1, %s32
      %p40 = scmp.ge.s32.totalorder %s39, 1
      %s41 = scalar_select %p40, 0, %s39
      %s42 = sadd.s32 1, %s31
      %s43 = scalar_select %p40, %s42, %s31
      %p44 = scmp.ge.s32.totalorder %s43, 2
      %s45 = scalar_select %p44, 0, %s43
      %s46 = sadd.s32 1, %s30
      %s47 = scalar_select %p44, %s46, %s30
      %p48 = scmp.ge.s32.totalorder %s47, 2
      %s49 = scalar_select %p48, 0, %s47
      %s50 = sadd.s32 %s31, %s32
      %s51 = sadd.s32 %s45, %s41
      %s52 = ssub.s32 %s30, %s49
      %s53 = ssub.s32 %s50, %s51
      %s54 = sor.u32 %s52, %s53
      %p55 = scmp.eq.s32.totalorder %s54, 0
      %s57 = sadd.s32 %s56, 1
      %s58 = scalar_select %p55, %s56, %s57
      %p61 = pneg %p55
      %p62 = scmp.eq.s32.totalorder %s23, 3
      %p63 = por %p61, %p62
      %p64 = scmp.ne.s32.totalorder %s56, %s59
      %p65 = scmp.eq.s32.totalorder %s23, 0
      %p66 = por %p64, %p65
      %p67 = scmp.ne.s32.totalorder %s56, %s59
      %p68 = scmp.eq.s32.totalorder %s28, 3
      %p69 = por %p67, %p68
      %p70 = scmp.ne.s32.totalorder %s59, %s60
      %p71 = scmp.eq.s32.totalorder %s28, 0
      %p72 = por %p70, %p71
      %p73 = scmp.ne.s32.totalorder %s59, %s60
      %p74 = scmp.eq.s32.totalorder %s29, 3
      %p75 = por %p73, %p74
      %p77 = scmp.ne.s32.totalorder %s60, %s76
      %p78 = scmp.eq.s32.totalorder %s29, 0
      %p79 = por %p77, %p78
      %s80 = sadd.s32 %s31, %s32
      %s81 = sadd.s32 %s45, %s41
      %s82 = ssub.s32 %s30, %s49
      %s83 = ssub.s32 %s80, %s81
      %s84 = sor.u32 %s82, %s83
      %p85 = scmp.eq.s32.totalorder %s84, 0
      %s87 = sadd.s32 %s86, 1
      %s88 = scalar_select %p85, %s86, %s87
      %p91 = pneg %p85
      %p92 = scmp.eq.s32.totalorder %s23, 3
      %p93 = por %p91, %p92
      %p94 = scmp.ne.s32.totalorder %s86, %s89
      %p95 = scmp.eq.s32.totalorder %s23, 0
      %p96 = por %p94, %p95
      %p97 = scmp.ne.s32.totalorder %s86, %s89
      %p98 = scmp.eq.s32.totalorder %s28, 3
      %p99 = por %p97, %p98
      %p100 = scmp.ne.s32.totalorder %s89, %s90
      %p101 = scmp.eq.s32.totalorder %s28, 0
      %p102 = por %p100, %p101
      %p103 = scmp.ne.s32.totalorder %s89, %s90
      %p104 = scmp.eq.s32.totalorder %s29, 3
      %p105 = por %p103, %p104
      %p107 = scmp.ne.s32.totalorder %s90, %s106
      %p108 = scmp.eq.s32.totalorder %s29, 0
      %p109 = por %p107, %p108
      %s110 = sadd.s32 %s31, %s32
      %s111 = sadd.s32 %s45, %s41
      %s112 = ssub.s32 %s30, %s49
      %s113 = ssub.s32 %s110, %s111
      %s114 = sor.u32 %s112, %s113
      %p115 = scmp.eq.s32.totalorder %s114, 0
      %s117 = sadd.s32 %s116, 1
      %s118 = scalar_select %p115, %s116, %s117
      %p121 = pneg %p115
      %p122 = scmp.eq.s32.totalorder %s23, 3
      %p123 = por %p121, %p122
      %p124 = scmp.ne.s32.totalorder %s116, %s119
      %p125 = scmp.eq.s32.totalorder %s23, 0
      %p126 = por %p124, %p125
      %p127 = scmp.ne.s32.totalorder %s116, %s119
      %p128 = scmp.eq.s32.totalorder %s28, 3
      %p129 = por %p127, %p128
      %p130 = scmp.ne.s32.totalorder %s119, %s120
      %p131 = scmp.eq.s32.totalorder %s28, 0
      %p132 = por %p130, %p131
      %p133 = scmp.ne.s32.totalorder %s119, %s120
      %p134 = scmp.eq.s32.totalorder %s29, 3
      %p135 = por %p133, %p134
      %p137 = scmp.ne.s32.totalorder %s120, %s136
      %p138 = scmp.eq.s32.totalorder %s29, 0
      %p139 = por %p137, %p138
      %s140 = sadd.s32 %s31, %s32
      %s141 = sadd.s32 %s45, %s41
      %s142 = ssub.s32 %s30, %s49
      %s143 = ssub.s32 %s140, %s141
      %s144 = sor.u32 %s142, %s143
      %p145 = scmp.eq.s32.totalorder %s144, 0
      %s147 = sadd.s32 %s146, 1
      %s148 = scalar_select %p145, %s146, %s147
      %p151 = pneg %p145
      %p152 = scmp.eq.s32.totalorder %s23, 3
      %p153 = por %p151, %p152
      %p154 = scmp.ne.s32.totalorder %s146, %s149
      %p155 = scmp.eq.s32.totalorder %s23, 0
      %p156 = por %p154, %p155
      %p157 = scmp.ne.s32.totalorder %s146, %s149
      %p158 = scmp.eq.s32.totalorder %s28, 3
      %p159 = por %p157, %p158
      %p160 = scmp.ne.s32.totalorder %s149, %s150
      %p161 = scmp.eq.s32.totalorder %s28, 0
      %p162 = por %p160, %p161
      %p163 = scmp.ne.s32.totalorder %s149, %s150
      %p164 = scmp.eq.s32.totalorder %s29, 3
      %p165 = por %p163, %p164
      %p167 = scmp.ne.s32.totalorder %s150, %s166
      %p168 = scmp.eq.s32.totalorder %s29, 0
      %p169 = por %p167, %p168
      %s170 = sadd.s32 %s31, %s32
      %s171 = sadd.s32 %s45, %s41
      %s172 = ssub.s32 %s30, %s49
      %s173 = ssub.s32 %s170, %s171
      %s174 = sor.u32 %s172, %s173
      %p175 = scmp.eq.s32.totalorder %s174, 0
      %s177 = sadd.s32 %s176, 1
      %s178 = scalar_select %p175, %s176, %s177
      %p181 = pneg %p175
      %p182 = scmp.eq.s32.totalorder %s23, 3
      %p183 = por %p181, %p182
      %p184 = scmp.ne.s32.totalorder %s176, %s179
      %p185 = scmp.eq.s32.totalorder %s23, 0
      %p186 = por %p184, %p185
      %p187 = scmp.ne.s32.totalorder %s176, %s179
      %p188 = scmp.eq.s32.totalorder %s28, 3
      %p189 = por %p187, %p188
      %p190 = scmp.ne.s32.totalorder %s179, %s180
      %p191 = scmp.eq.s32.totalorder %s28, 0
      %p192 = por %p190, %p191
      %p193 = scmp.ne.s32.totalorder %s179, %s180
      %p194 = scmp.eq.s32.totalorder %s29, 3
      %p195 = por %p193, %p194
      %p197 = scmp.ne.s32.totalorder %s180, %s196
      %p198 = scmp.eq.s32.totalorder %s29, 0
      %p199 = por %p197, %p198
      %s200 = ssub.s32 %s30, %s49
      %s201 = ssub.s32 %s31, %s45
      %s202 = sor.u32 %s200, %s201
      %p203 = scmp.eq.s32.totalorder %s202, 0
      %s205 = sadd.s32 %s204, 1
      %s206 = scalar_select %p203, %s204, %s205
      %p209 = pneg %p203
      %p210 = scmp.eq.s32.totalorder %s23, 3
      %p211 = por %p209, %p210
      %p212 = scmp.ne.s32.totalorder %s204, %s207
      %p213 = scmp.eq.s32.totalorder %s23, 0
      %p214 = por %p212, %p213
      %p215 = scmp.ne.s32.totalorder %s204, %s207
      %p216 = scmp.eq.s32.totalorder %s28, 3
      %p217 = por %p215, %p216
      %p218 = scmp.ne.s32.totalorder %s207, %s208
      %p219 = scmp.eq.s32.totalorder %s28, 0
      %p220 = por %p218, %p219
      %p221 = scmp.ne.s32.totalorder %s207, %s208
      %p222 = scmp.eq.s32.totalorder %s29, 3
      %p223 = por %p221, %p222
      %p225 = scmp.ne.s32.totalorder %s208, %s224
      %p226 = scmp.eq.s32.totalorder %s29, 0
      %p227 = por %p225, %p226
      %p228 = scmp.le.s32.totalorder 1, %s23
      %p229 = scmp.lt.s32.totalorder %s23, 5
      %p230 = pnand %p228, %p229
      %p231 = pneg %p230
      // Predicated region
      $region9: #{tpu_custom_call.1} parent=5 // pred_check
        _
      $region10: #{tpu_custom_call.1} parent=5 // pred_check_branch
        %233 = sbr.rel (%p230) target = $region12
      $region11: #{tpu_custom_call.1} parent=5 // pred_region
        %s234 = ssub.s32 %s23, 1
      $region12: #{tpu_custom_call.1} parent=5 // pred_fallthru
        _
      %p235 = scmp.lt.s32.totalorder %s23, 4
      // Predicated region
      $region13: #{tpu_custom_call.1} parent=5 // pred_check
        %p236 = pneg %p235
      $region14: #{tpu_custom_call.1} parent=5 // pred_check_branch
        %238 = sbr.rel (%p236) target = $region16
      $region15: #{tpu_custom_call.1} parent=5 // pred_region
        // Predicated region
        $region17: #{tpu_custom_call.1} parent=15 // pred_check
          %p239 = pneg %p66
        $region18: #{tpu_custom_call.1} parent=15 // pred_check_branch
          %241 = sbr.rel (%p239) target = $region20
        $region19: #{tpu_custom_call.1} parent=15 // pred_region
          #allocation13 [shape = 'u32[6]{0}', space=smem, size = 0x18, scoped, tag = 'DMA stride descriptor']
          %s242 = sand.u32 %s56, 1
          %s243 = scalar_lea.sflag [#allocation3], %s242
          %s244 = sand.u32 %s56, 1
          %s245 = smul.addr %s244, 192
          %s246 = scalar_lea.vmem [#allocation2], %s245
          %s247 = sadd.s32 %s31, %s32
          %s248 = smul.u32 8, %s247
          %s250 = ssub.s32 3072, 3072
          %251 = vsyncadd %s243, %s250
          %s252 = smul.addr %s30, 48
          %s253 = sadd.s32 %s248, %s252
          %s254 = smul.addr %s253, 128
          %s255 = scalar_lea.hbm %s0, %s254
          %s257 = sshll.u32 1, 14
          %s258 = sxor.u32 4294967295, %s257
          %s260 = sld [smem:[#allocation0]]
          %s261 = sadd.s32 2, %s260
          %s263 = sshll.u32 7, 26
          %s264 = sxor.u32 4294967295, %s263
          %s265 = sand.u32 0, %s264
          %s266 = sshll.u32 %s261, 26
          %s267 = sor.u32 %s265, %s266
          %s268 = sshll.u32 %s246, 4
          %s269 = int_to_ptr.vmem [resolvable:$true] %s268
          %275 = sst [smem:[#allocation13]] 2048
          %s276 = scalar_lea.smem [#allocation13], 1
          %277 = sst [smem:[%s276]] 1024
          %s278 = scalar_lea.smem [#allocation13], 2
          %279 = sst [smem:[%s278]] 8
          %s280 = scalar_lea.smem [#allocation13], 3
          %281 = sst [smem:[%s280]] 128
          %s282 = scalar_lea.smem [#allocation13], 4
          %283 = sst [smem:[%s282]] 128
          %s284 = scalar_lea.smem [#allocation13], 5
          %285 = sst [smem:[%s284]] 8
          %287 = dma.general %s255, 3072, %s269, %s243, 131072, [#allocation13], %s267, 0
        $region20: #{tpu_custom_call.1} parent=15 // pred_fallthru
          _
        // Predicated region
        $region21: #{tpu_custom_call.1} parent=15 // pred_check
          %p288 = pneg %p96
        $region22: #{tpu_custom_call.1} parent=15 // pred_check_branch
          %290 = sbr.rel (%p288) target = $region24
        $region23: #{tpu_custom_call.1} parent=15 // pred_region
          %s291 = sand.u32 %s23, 1
          %s292 = scalar_lea.sflag [#allocation6], %s291
          %s293 = sand.u32 %s86, 1
          %s294 = smul.addr %s293, 32
          %s295 = scalar_lea.vmem [#allocation5], %s294
          %s296 = sadd.s32 %s31, %s32
          %s297 = smul.u32 8, %s296
          %s299 = ssub.s32 512, 512
          %300 = vsyncadd %s292, %s299
          %s301 = smul.addr %s30, 16
          %s302 = sadd.s32 %s297, %s301
          %s303 = smul.addr %s302, 64
          %s304 = scalar_lea.hbm %s1, %s303
          %s305 = sshll.u32 %s295, 4
          %s306 = int_to_ptr.vmem [resolvable:$true] %s305
          %311 = dma.hbm_to_vmem [thread:$0]  %s304, 512, %s306, %s292, 64, 64, 4
        $region24: #{tpu_custom_call.1} parent=15 // pred_fallthru
          _
        // Predicated region
        $region25: #{tpu_custom_call.1} parent=15 // pred_check
          %p312 = pneg %p126
        $region26: #{tpu_custom_call.1} parent=15 // pred_check_branch
          %314 = sbr.rel (%p312) target = $region28
        $region27: #{tpu_custom_call.1} parent=15 // pred_region
          %s315 = sand.u32 %s23, 1
          %s316 = scalar_lea.sflag [#allocation6], %s315
          %s317 = sand.u32 %s116, 1
          %s318 = smul.addr %s317, 16
          %s319 = scalar_lea.vmem [#allocation7], %s318
          %s320 = sadd.s32 %s31, %s32
          %s321 = smul.u32 2, %s320
          %s323 = ssub.s32 256, 256
          %324 = vsyncadd %s316, %s323
          %s325 = smul.addr %s30, 4
          %s326 = sadd.s32 %s321, %s325
          %s327 = smul.addr %s326, 128
          %s328 = scalar_lea.hbm %s2, %s327
          %s329 = sshll.u32 %s319, 4
          %s330 = int_to_ptr.vmem [resolvable:$true] %s329
          %335 = dma.hbm_to_vmem [thread:$0]  %s328, 256, %s330, %s316, 128, 128, 8
        $region28: #{tpu_custom_call.1} parent=15 // pred_fallthru
          _
        // Predicated region
        $region29: #{tpu_custom_call.1} parent=15 // pred_check
          %p336 = pneg %p156
        $region30: #{tpu_custom_call.1} parent=15 // pred_check_branch
          %338 = sbr.rel (%p336) target = $region32
        $region31: #{tpu_custom_call.1} parent=15 // pred_region
          %s339 = sand.u32 %s23, 1
          %s340 = scalar_lea.sflag [#allocation9], %s339
          %s341 = sand.u32 %s146, 1
          %s342 = smul.addr %s341, 16
          %s343 = scalar_lea.vmem [#allocation8], %s342
          %s344 = sadd.s32 %s31, %s32
          %s345 = smul.u32 2, %s344
          %s347 = ssub.s32 256, 256
          %348 = vsyncadd %s340, %s347
          %s349 = smul.addr %s30, 4
          %s350 = sadd.s32 %s345, %s349
          %s351 = smul.addr %s350, 128
          %s352 = scalar_lea.hbm %s3, %s351
          %s353 = sshll.u32 %s343, 4
          %s354 = int_to_ptr.vmem [resolvable:$true] %s353
          %359 = dma.hbm_to_vmem [thread:$0]  %s352, 256, %s354, %s340, 128, 128, 8
        $region32: #{tpu_custom_call.1} parent=15 // pred_fallthru
          _
        // Predicated region
        $region33: #{tpu_custom_call.1} parent=15 // pred_check
          %p360 = pneg %p186
        $region34: #{tpu_custom_call.1} parent=15 // pred_check_branch
          %362 = sbr.rel (%p360) target = $region36
        $region35: #{tpu_custom_call.1} parent=15 // pred_region
          %s363 = sand.u32 %s23, 1
          %s364 = scalar_lea.sflag [#allocation9], %s363
          %s365 = sand.u32 %s176, 1
          %s366 = smul.addr %s365, 16
          %s367 = scalar_lea.vmem [#allocation10], %s366
          %s368 = sadd.s32 %s31, %s32
          %s369 = smul.u32 2, %s368
          %s371 = ssub.s32 256, 256
          %372 = vsyncadd %s364, %s371
          %s373 = smul.addr %s30, 4
          %s374 = sadd.s32 %s369, %s373
          %s375 = smul.addr %s374, 128
          %s376 = scalar_lea.hbm %s4, %s375
          %s377 = sshll.u32 %s367, 4
          %s378 = int_to_ptr.vmem [resolvable:$true] %s377
          %383 = dma.hbm_to_vmem [thread:$0]  %s376, 256, %s378, %s364, 128, 128, 8
        $region36: #{tpu_custom_call.1} parent=15 // pred_fallthru
          _
      $region16: #{tpu_custom_call.1} parent=5 // pred_fallthru
        _
      %p384 = scmp.le.s32.totalorder 1, %s23
      %p385 = scmp.lt.s32.totalorder %s23, 5
      %p386 = pnand %p384, %p385
      %p387 = pneg %p386
      // Predicated region
      $region37: #{tpu_custom_call.1} parent=5 // pred_check
        _
      $region38: #{tpu_custom_call.1} parent=5 // pred_check_branch
        %389 = sbr.rel (%p386) target = $region40
      $region39: #{tpu_custom_call.1} parent=5 // pred_region
        %s390 = ssub.s32 %s23, 1
        %s391 = sand.u32 %s59, 1
        %s392 = scalar_lea.sflag [#allocation3], %s391
        %s393 = sand.u32 %s59, 1
        %s394 = smul.addr %s393, 192
        %s395 = scalar_lea.vmem [#allocation2], %s394
        // Predicated region
        $region41: #{tpu_custom_call.1} parent=39 // pred_check
          %p396 = pneg %p72
        $region42: #{tpu_custom_call.1} parent=39 // pred_check_branch
          %398 = sbr.rel (%p396) target = $region44
        $region43: #{tpu_custom_call.1} parent=39 // pred_region
          %399 = dma.done %s392, 3072
        $region44: #{tpu_custom_call.1} parent=39 // pred_fallthru
          _
        %s400 = sand.u32 %s28, 1
        %s401 = scalar_lea.sflag [#allocation6], %s400
        %s402 = sand.u32 %s89, 1
        %s403 = smul.addr %s402, 32
        %s404 = scalar_lea.vmem [#allocation5], %s403
        // Predicated region
        $region45: #{tpu_custom_call.1} parent=39 // pred_check
          %p405 = pneg %p102
        $region46: #{tpu_custom_call.1} parent=39 // pred_check_branch
          %407 = sbr.rel (%p405) target = $region48
        $region47: #{tpu_custom_call.1} parent=39 // pred_region
          %408 = dma.done %s401, 512
        $region48: #{tpu_custom_call.1} parent=39 // pred_fallthru
          _
        %s409 = sand.u32 %s28, 1
        %s410 = scalar_lea.sflag [#allocation6], %s409
        %s411 = sand.u32 %s119, 1
        %s412 = smul.addr %s411, 16
        %s413 = scalar_lea.vmem [#allocation7], %s412
        // Predicated region
        $region49: #{tpu_custom_call.1} parent=39 // pred_check
          %p414 = pneg %p132
        $region50: #{tpu_custom_call.1} parent=39 // pred_check_branch
          %416 = sbr.rel (%p414) target = $region52
        $region51: #{tpu_custom_call.1} parent=39 // pred_region
          %417 = dma.done %s410, 256
        $region52: #{tpu_custom_call.1} parent=39 // pred_fallthru
          _
        %s418 = sand.u32 %s28, 1
        %s419 = scalar_lea.sflag [#allocation9], %s418
        %s420 = sand.u32 %s149, 1
        %s421 = smul.addr %s420, 16
        %s422 = scalar_lea.vmem [#allocation8], %s421
        // Predicated region
        $region53: #{tpu_custom_call.1} parent=39 // pred_check
          %p423 = pneg %p162
        $region54: #{tpu_custom_call.1} parent=39 // pred_check_branch
          %425 = sbr.rel (%p423) target = $region56
        $region55: #{tpu_custom_call.1} parent=39 // pred_region
          %426 = dma.done %s419, 256
        $region56: #{tpu_custom_call.1} parent=39 // pred_fallthru
          _
        %s427 = sand.u32 %s28, 1
        %s428 = scalar_lea.sflag [#allocation9], %s427
        %s429 = sand.u32 %s179, 1
        %s430 = smul.addr %s429, 16
        %s431 = scalar_lea.vmem [#allocation10], %s430
        // Predicated region
        $region57: #{tpu_custom_call.1} parent=39 // pred_check
          %p432 = pneg %p192
        $region58: #{tpu_custom_call.1} parent=39 // pred_check_branch
          %434 = sbr.rel (%p432) target = $region60
        $region59: #{tpu_custom_call.1} parent=39 // pred_region
          %435 = dma.done %s428, 256
        $region60: #{tpu_custom_call.1} parent=39 // pred_fallthru
          _
        %s436 = sand.u32 %s59, 1
        %s437 = scalar_lea.sflag [#allocation3], %s436
        %s438 = sand.u32 %s59, 1
        %s439 = smul.addr %s438, 192
        %s440 = scalar_lea.vmem [#allocation2], %s439
        %p441 = pneg %p72
        %p442 = pneg %p69
        %s443 = sand.u32 %s28, 1
        %s444 = scalar_lea.sflag [#allocation6], %s443
        %s445 = sand.u32 %s89, 1
        %s446 = smul.addr %s445, 32
        %s447 = scalar_lea.vmem [#allocation5], %s446
        %p448 = pneg %p102
        %p449 = pneg %p99
        %s450 = sand.u32 %s28, 1
        %s451 = scalar_lea.sflag [#allocation6], %s450
        %s452 = sand.u32 %s119, 1
        %s453 = smul.addr %s452, 16
        %s454 = scalar_lea.vmem [#allocation7], %s453
        %p455 = pneg %p132
        %p456 = pneg %p129
        %s457 = sand.u32 %s28, 1
        %s458 = scalar_lea.sflag [#allocation9], %s457
        %s459 = sand.u32 %s149, 1
        %s460 = smul.addr %s459, 16
        %s461 = scalar_lea.vmem [#allocation8], %s460
        %p462 = pneg %p162
        %p463 = pneg %p159
        %s464 = sand.u32 %s28, 1
        %s465 = scalar_lea.sflag [#allocation9], %s464
        %s466 = sand.u32 %s179, 1
        %s467 = smul.addr %s466, 16
        %s468 = scalar_lea.vmem [#allocation10], %s467
        %p469 = pneg %p192
        %p470 = pneg %p189
        %p471 = pneg %p220
        %p472 = pneg %p217
        %s473 = sand.u32 %s207, 1
        %s474 = scalar_lea.sflag [#allocation4], %s473
        %s475 = sand.u32 %s207, 1
        %s476 = smul.addr %s475, 64
        %s477 = scalar_lea.vmem [#allocation11], %s476
        %s478 = sadd.s32 %s34, %s35
        %s479 = smul.u32 8, %s478
        %s480 = sadd.s32 %s34, %s35
        %s481 = smul.u32 8, %s480
        %s482 = sadd.s32 %s34, %s35
        %s483 = smul.u32 2, %s482
        %s484 = sadd.s32 %s34, %s35
        %s485 = smul.u32 2, %s484
        %s486 = sadd.s32 %s34, %s35
        %s487 = smul.u32 2, %s486
        %p488 = scmp.eq.s32.totalorder %s35, 0
        // Predicated region
        $region61: #{tpu_custom_call.1} parent=39 // pred_check
          %p489 = pneg %p488
        $region62: #{tpu_custom_call.1} parent=39 // pred_check_branch
          %491 = sbr.rel (%p489) target = $region64
        $region63: #{tpu_custom_call.1} parent=39 // pred_region
          %492 = vst [vmem:[%s477] sm:$0xff] 0.0
          %493 = vst [vmem:[%s477 + $0x8] sm:$0xff] 0.0
          %494 = vst [vmem:[%s477 + $0x10] sm:$0xff] 0.0
          %495 = vst [vmem:[%s477 + $0x18] sm:$0xff] 0.0
          %496 = vst [vmem:[%s477 + $0x20] sm:$0xff] 0.0
          %497 = vst [vmem:[%s477 + $0x28] sm:$0xff] 0.0
          %498 = vst [vmem:[%s477 + $0x30] sm:$0xff] 0.0
          %499 = vst [vmem:[%s477 + $0x38] sm:$0xff] 0.0
        $region64: #{tpu_custom_call.1} parent=39 // pred_fallthru
          _
        %v500 = vld [vmem:[%s395] sm:$0xff]
        %v501 = vld [vmem:[%s395 + $0x8] sm:$0xff]
        %v502 = vld [vmem:[%s395 + $0x10] sm:$0xff]
        %v503 = vld [vmem:[%s395 + $0x18] sm:$0xff]
        %v504 = vld [vmem:[%s395 + $0x20] sm:$0xff]
        %v505 = vld [vmem:[%s395 + $0x28] sm:$0xff]
        %v506 = vld [vmem:[%s395 + $0x30] sm:$0xff]
        %v507 = vld [vmem:[%s395 + $0x38] sm:$0xff]
        %s508 = scalar_lea.vmem %s395, 64 [#allocation2]
        %v509 = vld [vmem:[%s508] sm:$0xff]
        %v510 = vld [vmem:[%s508 + $0x8] sm:$0xff]
        %v511 = vld [vmem:[%s508 + $0x10] sm:$0xff]
        %v512 = vld [vmem:[%s508 + $0x18] sm:$0xff]
        %v513 = vld [vmem:[%s508 + $0x20] sm:$0xff]
        %v514 = vld [vmem:[%s508 + $0x28] sm:$0xff]
        %v515 = vld [vmem:[%s508 + $0x30] sm:$0xff]
        %v516 = vld [vmem:[%s508 + $0x38] sm:$0xff]
        %s517 = scalar_lea.vmem %s395, 128 [#allocation2]
        %v518 = vld [vmem:[%s517] sm:$0xff]
        %v519 = vld [vmem:[%s517 + $0x8] sm:$0xff]
        %v520 = vld [vmem:[%s517 + $0x10] sm:$0xff]
        %v521 = vld [vmem:[%s517 + $0x18] sm:$0xff]
        %v522 = vld [vmem:[%s517 + $0x20] sm:$0xff]
        %v523 = vld [vmem:[%s517 + $0x28] sm:$0xff]
        %v524 = vld [vmem:[%s517 + $0x30] sm:$0xff]
        %v525 = vld [vmem:[%s517 + $0x38] sm:$0xff]
        %v526 = vld [vmem:[%s404] sm:$0xf]
        %v527 = vld [vmem:[%s404 + $0x4] sm:$0xf]
        %v528 = vld [vmem:[%s404 + $0x8] sm:$0xf]
        %v529 = vld [vmem:[%s404 + $0xc] sm:$0xf]
        %v530 = vld [vmem:[%s404 + $0x10] sm:$0xf]
        %v531 = vld [vmem:[%s404 + $0x14] sm:$0xf]
        %v532 = vld [vmem:[%s404 + $0x18] sm:$0xf]
        %v533 = vld [vmem:[%s404 + $0x1c] sm:$0xf]
        %v534 = vunpack.c.l.bf16 %v526
        %v535 = vunpack.c.l.bf16 %v527
        %v536 = vunpack.c.l.bf16 %v528
        %v537 = vunpack.c.l.bf16 %v529
        %v538 = vunpack.c.l.bf16 %v530
        %v539 = vunpack.c.l.bf16 %v531
        %v540 = vunpack.c.l.bf16 %v532
        %v541 = vunpack.c.l.bf16 %v533
        %v542 = vld [vmem:[%s413] sm:$0xff]
        %v543 = vld [vmem:[%s413 + $0x8] sm:$0xff]
        %v544 = vunpack.c.0.s8 %v542
        %v545 = vunpack.c.1.s8 %v542
        %v546 = vunpack.c.2.s8 %v542
        %v547 = vunpack.c.3.s8 %v542
        %v548 = vunpack.c.0.s8 %v543
        %v549 = vunpack.c.1.s8 %v543
        %v550 = vunpack.c.2.s8 %v543
        %v551 = vunpack.c.3.s8 %v543
        %v552 = vcvt.s32.f32 %v544
        %v553 = vcvt.s32.f32 %v545
        %v554 = vcvt.s32.f32 %v546
        %v555 = vcvt.s32.f32 %v547
        %v556 = vcvt.s32.f32 %v548
        %v557 = vcvt.s32.f32 %v549
        %v558 = vcvt.s32.f32 %v550
        %v559 = vcvt.s32.f32 %v551
        %v560 = vld [vmem:[%s422] sm:$0xff]
        %v561 = vld [vmem:[%s422 + $0x8] sm:$0xff]
        %v562 = vunpack.c.0.s8 %v560
        %v563 = vunpack.c.1.s8 %v560
        %v564 = vunpack.c.2.s8 %v560
        %v565 = vunpack.c.3.s8 %v560
        %v566 = vunpack.c.0.s8 %v561
        %v567 = vunpack.c.1.s8 %v561
        %v568 = vunpack.c.2.s8 %v561
        %v569 = vunpack.c.3.s8 %v561
        %v570 = vcvt.s32.f32 %v562
        %v571 = vcvt.s32.f32 %v563
        %v572 = vcvt.s32.f32 %v564
        %v573 = vcvt.s32.f32 %v565
        %v574 = vcvt.s32.f32 %v566
        %v575 = vcvt.s32.f32 %v567
        %v576 = vcvt.s32.f32 %v568
        %v577 = vcvt.s32.f32 %v569
        %v578 = vld [vmem:[%s431] sm:$0xff]
        %v579 = vld [vmem:[%s431 + $0x8] sm:$0xff]
        %v580 = vunpack.c.0.s8 %v578
        %v581 = vunpack.c.1.s8 %v578
        %v582 = vunpack.c.2.s8 %v578
        %v583 = vunpack.c.3.s8 %v578
        %v584 = vunpack.c.0.s8 %v579
        %v585 = vunpack.c.1.s8 %v579
        %v586 = vunpack.c.2.s8 %v579
        %v587 = vunpack.c.3.s8 %v579
        %v588 = vcvt.s32.f32 %v580
        %v589 = vcvt.s32.f32 %v581
        %v590 = vcvt.s32.f32 %v582
        %v591 = vcvt.s32.f32 %v583
        %v592 = vcvt.s32.f32 %v584
        %v593 = vcvt.s32.f32 %v585
        %v594 = vcvt.s32.f32 %v586
        %v595 = vcvt.s32.f32 %v587
        %v596 = vmul.f32 %v570, %v588
        %v597 = vmul.f32 %v571, %v589
        %v598 = vmul.f32 %v572, %v590
        %v599 = vmul.f32 %v573, %v591
        %v600 = vmul.f32 %v574, %v592
        %v601 = vmul.f32 %v575, %v593
        %v602 = vmul.f32 %v576, %v594
        %v603 = vmul.f32 %v577, %v595
        %v604 = vadd.f32 %v596, %v597
        %v605 = vadd.f32 %v604, %v598
        %v606 = vadd.f32 %v605, %v599
        %v607 = vadd.f32 %v606, %v600
        %v608 = vadd.f32 %v607, %v601
        %v609 = vadd.f32 %v608, %v602
        %v610 = vadd.f32 %v609, %v603
        %v611 = vadd.f32 %v588, %v589
        %v612 = vadd.f32 %v611, %v590
        %v613 = vadd.f32 %v612, %v591
        %v614 = vadd.f32 %v613, %v592
        %v615 = vadd.f32 %v614, %v593
        %v616 = vadd.f32 %v615, %v594
        %v617 = vadd.f32 %v616, %v595
        %v618 = vmul.f32 %v500, %v596
        %v619 = vmul.f32 %v501, %v597
        %v620 = vmul.f32 %v502, %v598
        %v621 = vmul.f32 %v503, %v599
        %v622 = vmul.f32 %v504, %v600
        %v623 = vmul.f32 %v505, %v601
        %v624 = vmul.f32 %v506, %v602
        %v625 = vmul.f32 %v507, %v603
        %v626 = vadd.f32 %v618, %v619
        %v627 = vadd.f32 %v626, %v620
        %v628 = vadd.f32 %v627, %v621
        %v629 = vadd.f32 %v628, %v622
        %v630 = vadd.f32 %v629, %v623
        %v631 = vadd.f32 %v630, %v624
        %v632 = vadd.f32 %v631, %v625
        %v633 = vmul.f32 %v500, %v588
        %v634 = vmul.f32 %v501, %v589
        %v635 = vmul.f32 %v502, %v590
        %v636 = vmul.f32 %v503, %v591
        %v637 = vmul.f32 %v504, %v592
        %v638 = vmul.f32 %v505, %v593
        %v639 = vmul.f32 %v506, %v594
        %v640 = vmul.f32 %v507, %v595
        %v641 = vadd.f32 %v633, %v634
        %v642 = vadd.f32 %v641, %v635
        %v643 = vadd.f32 %v642, %v636
        %v644 = vadd.f32 %v643, %v637
        %v645 = vadd.f32 %v644, %v638
        %v646 = vadd.f32 %v645, %v639
        %v647 = vadd.f32 %v646, %v640
        %v648 = vmul.f32 %v518, %v596
        %v649 = vmul.f32 %v519, %v597
        %v650 = vmul.f32 %v520, %v598
        %v651 = vmul.f32 %v521, %v599
        %v652 = vmul.f32 %v522, %v600
        %v653 = vmul.f32 %v523, %v601
        %v654 = vmul.f32 %v524, %v602
        %v655 = vmul.f32 %v525, %v603
        %v656 = vadd.f32 %v648, %v649
        %v657 = vadd.f32 %v656, %v650
        %v658 = vadd.f32 %v657, %v651
        %v659 = vadd.f32 %v658, %v652
        %v660 = vadd.f32 %v659, %v653
        %v661 = vadd.f32 %v660, %v654
        %v662 = vadd.f32 %v661, %v655
        %v663 = vmul.f32 %v518, %v588
        %v664 = vmul.f32 %v519, %v589
        %v665 = vmul.f32 %v520, %v590
        %v666 = vmul.f32 %v521, %v591
        %v667 = vmul.f32 %v522, %v592
        %v668 = vmul.f32 %v523, %v593
        %v669 = vmul.f32 %v524, %v594
        %v670 = vmul.f32 %v525, %v595
        %v671 = vadd.f32 %v663, %v664
        %v672 = vadd.f32 %v671, %v665
        %v673 = vadd.f32 %v672, %v666
        %v674 = vadd.f32 %v673, %v667
        %v675 = vadd.f32 %v674, %v668
        %v676 = vadd.f32 %v675, %v669
        %v677 = vadd.f32 %v676, %v670
        %v678 = vsub.f32 %v509, %v534
        %v679 = vsub.f32 %v510, %v535
        %v680 = vsub.f32 %v511, %v536
        %v681 = vsub.f32 %v512, %v537
        %v682 = vsub.f32 %v513, %v538
        %v683 = vsub.f32 %v514, %v539
        %v684 = vsub.f32 %v515, %v540
        %v685 = vsub.f32 %v516, %v541
        %v686 = vand.u32 2147483647, %v678
        %v687 = vand.u32 2147483647, %v679
        %v688 = vand.u32 2147483647, %v680
        %v689 = vand.u32 2147483647, %v681
        %v690 = vand.u32 2147483647, %v682
        %v691 = vand.u32 2147483647, %v683
        %v692 = vand.u32 2147483647, %v684
        %v693 = vand.u32 2147483647, %v685
        %v694 = vmul.f32 %v686, %v552
        %v695 = vmul.f32 %v687, %v553
        %v696 = vmul.f32 %v688, %v554
        %v697 = vmul.f32 %v689, %v555
        %v698 = vmul.f32 %v690, %v556
        %v699 = vmul.f32 %v691, %v557
        %v700 = vmul.f32 %v692, %v558
        %v701 = vmul.f32 %v693, %v559
        %v702 = vadd.f32 %v694, %v695
        %v703 = vadd.f32 %v702, %v696
        %v704 = vadd.f32 %v703, %v697
        %v705 = vadd.f32 %v704, %v698
        %v706 = vadd.f32 %v705, %v699
        %v707 = vadd.f32 %v706, %v700
        %v708 = vadd.f32 %v707, %v701
        %v709 = vadd.f32 %v552, %v553
        %v710 = vadd.f32 %v709, %v554
        %v711 = vadd.f32 %v710, %v555
        %v712 = vadd.f32 %v711, %v556
        %v713 = vadd.f32 %v712, %v557
        %v714 = vadd.f32 %v713, %v558
        %v715 = vadd.f32 %v714, %v559
        %v716 = vld [vmem:[%s477] sm:$0xff]
        %v717 = vld [vmem:[%s477 + $0x8] sm:$0xff]
        %v718 = vld [vmem:[%s477 + $0x10] sm:$0xff]
        %v719 = vld [vmem:[%s477 + $0x18] sm:$0xff]
        %v720 = vld [vmem:[%s477 + $0x20] sm:$0xff]
        %v721 = vld [vmem:[%s477 + $0x28] sm:$0xff]
        %v722 = vld [vmem:[%s477 + $0x30] sm:$0xff]
        %v723 = vld [vmem:[%s477 + $0x38] sm:$0xff]
        %v724 = vadd.f32 %v716, %v610
        %v725 = vadd.f32 %v717, %v617
        %v726 = vadd.f32 %v718, %v632
        %v727 = vadd.f32 %v719, %v647
        %v728 = vadd.f32 %v720, %v662
        %v729 = vadd.f32 %v721, %v677
        %v730 = vadd.f32 %v722, %v708
        %v731 = vadd.f32 %v723, %v715
        %732 = vst [vmem:[%s477] sm:$0xff] %v724
        %733 = vst [vmem:[%s477 + $0x8] sm:$0xff] %v725
        %734 = vst [vmem:[%s477 + $0x10] sm:$0xff] %v726
        %735 = vst [vmem:[%s477 + $0x18] sm:$0xff] %v727
        %736 = vst [vmem:[%s477 + $0x20] sm:$0xff] %v728
        %737 = vst [vmem:[%s477 + $0x28] sm:$0xff] %v729
        %738 = vst [vmem:[%s477 + $0x30] sm:$0xff] %v730
        %739 = vst [vmem:[%s477 + $0x38] sm:$0xff] %v731
        %s740 = sand.u32 %s207, 1
        %s741 = scalar_lea.sflag [#allocation4], %s740
        %s742 = sand.u32 %s207, 1
        %s743 = smul.addr %s742, 64
        %s744 = scalar_lea.vmem [#allocation11], %s743
        // Predicated region
        $region65: #{tpu_custom_call.1} parent=39 // pred_check
          %p745 = pneg %p217
        $region66: #{tpu_custom_call.1} parent=39 // pred_check_branch
          %747 = sbr.rel (%p745) target = $region68
        $region67: #{tpu_custom_call.1} parent=39 // pred_region
          %s749 = ssub.s32 1024, 1024
          %750 = vsyncadd %s741, %s749
          %s751 = smul.addr %s34, 8
          %s752 = smul.addr %s33, 16
          %s753 = sadd.s32 %s751, %s752
          %s754 = smul.addr %s753, 128
          %s755 = scalar_lea.hbm %s5, %s754
          %s756 = sshll.u32 %s744, 4
          %s757 = int_to_ptr.vmem [resolvable:$true] %s756
          %762 = dma.vmem_to_hbm [thread:$0]  %s757, 1024, %s755, %s741, 128, 128, 8
        $region68: #{tpu_custom_call.1} parent=39 // pred_fallthru
          _
      $region40: #{tpu_custom_call.1} parent=5 // pred_fallthru
        _
      %p763 = scmp.le.s32.totalorder 2, %s23
      // Predicated region
      $region69: #{tpu_custom_call.1} parent=5 // pred_check
        %p764 = pneg %p763
      $region70: #{tpu_custom_call.1} parent=5 // pred_check_branch
        %766 = sbr.rel (%p764) target = $region72
      $region71: #{tpu_custom_call.1} parent=5 // pred_region
        %s767 = ssub.s32 %s23, 2
        // Predicated region
        $region73: #{tpu_custom_call.1} parent=71 // pred_check
          %p768 = pneg %p223
        $region74: #{tpu_custom_call.1} parent=71 // pred_check_branch
          %770 = sbr.rel (%p768) target = $region76
        $region75: #{tpu_custom_call.1} parent=71 // pred_region
          %s771 = sand.u32 %s208, 1
          %s772 = scalar_lea.sflag [#allocation4], %s771
          %s773 = sand.u32 %s208, 1
          %s774 = smul.addr %s773, 64
          %s775 = scalar_lea.vmem [#allocation11], %s774
          %776 = dma.done %s772, 1024
        $region76: #{tpu_custom_call.1} parent=71 // pred_fallthru
          _
      $region72: #{tpu_custom_call.1} parent=5 // pred_fallthru
        _
    $region6: #{tpu_custom_call.1} parent=1 // loop_footer
      %s27 = sadd.s32 1, %s23
    $region7: #{tpu_custom_call.1} parent=1 // loop_footer_branch
      %22 = sbr.rel target = $region3
    $region8: #{tpu_custom_call.1} parent=1 // loop_exit
      _
    %777 = vsyncpa [#allocation3], 1
    %s778 = scalar_lea.sflag [#allocation3], 1
    %779 = vsyncpa %s778, 1
    %780 = vsyncpa [#allocation6], 1
    %s781 = scalar_lea.sflag [#allocation6], 1
    %782 = vsyncpa %s781, 1
    %783 = vsyncpa [#allocation9], 1
    %s784 = scalar_lea.sflag [#allocation9], 1
    %785 = vsyncpa %s784, 1
    %786 = vsyncpa [#allocation4], 1
    %s787 = scalar_lea.sflag [#allocation4], 1
    %788 = vsyncpa %s787, 1

</llo_original>
